<compile_context>
chip_gen: v7x
topology: tpu7x:2x2x1
jax: 0.10.0
libtpu: 0.0.40
codegen_flags: <defaults>
</compile_context>

<pallas_src>
import functools

import jax
import jax.numpy as jnp
from jax.experimental import pallas as pl
from jax.experimental.pallas import tpu as pltpu


OUT_PAD = 128  # lane-dense padded fc4 output width


def _round_up(x, m):
    return (x + m - 1) // m * m


def _packed_layout(surge_dim, building_dim, wind_dim, hidden_dim):
    """Row offsets of each parameter inside the packed (rows, ncols) block.
    Every sub-block starts on an 8-row (sublane) boundary."""
    h2 = 2 * hidden_dim
    o_ws = 0
    o_wb = o_ws + _round_up(surge_dim, 8)
    o_ww = o_wb + _round_up(building_dim, 8)
    o_b12 = o_ww + _round_up(wind_dim, 8)
    o_w3 = o_b12 + 8
    o_b3 = o_w3 + _round_up(h2, 8)
    o_w4 = o_b3 + 8
    o_b4 = o_w4 + _round_up(hidden_dim, 8)
    rows = o_b4 + 8
    ncols = max(_round_up(h2, 128), OUT_PAD)
    offs = dict(ws=o_ws, wb=o_wb, ww=o_ww, b12=o_b12,
                w3=o_w3, b3=o_b3, w4=o_w4, b4=o_b4)
    return offs, rows, ncols


def prepare_params(params, surge_dim, building_dim, wind_dim, hidden_dim):
    """One-time packing of all weights/biases into a single lane-dense f32
    block (one parameter operand / one DMA for the kernel).

    `params` weights are stored [in_features, out_features]."""
    w1, b1, w2, b2, w3, b3, w4, b4 = params
    h = hidden_dim
    h2 = 2 * h
    s, bd, wd = surge_dim, building_dim, wind_dim
    offs, rows, ncols = _packed_layout(s, bd, wd, h)

    p = jnp.zeros((rows, ncols), jnp.float32)
    # --- fused fc1/fc2 weight, split per input ([h1 | h2] on the out axis) ---
    # surge rows feed only the fc1 half
    p = p.at[offs["ws"]:offs["ws"] + s, 0:h].set(w1[0:s, :])
    # building rows feed both halves (fc1 rows surge_dim:, fc2 rows wind_dim:)
    p = p.at[offs["wb"]:offs["wb"] + bd, 0:h].set(w1[s:s + bd, :])
    p = p.at[offs["wb"]:offs["wb"] + bd, h:h2].set(w2[wd:wd + bd, :])
    # wind rows feed only the fc2 half
    p = p.at[offs["ww"]:offs["ww"] + wd, h:h2].set(w2[0:wd, :])
    # fused bias [b1 | b2]
    p = p.at[offs["b12"], 0:h].set(b1)
    p = p.at[offs["b12"], h:h2].set(b2)
    # fc3 (unsplit: h12 == cat(x1, x2) already has the right row order)
    p = p.at[offs["w3"]:offs["w3"] + h2, 0:h].set(w3)
    p = p.at[offs["b3"], 0:h].set(b3)
    # fc4, zero-padded to OUT_PAD lanes for a lane-dense store
    p = p.at[offs["w4"]:offs["w4"] + h, 0:w4.shape[1]].set(w4)
    p = p.at[offs["b4"], 0:b4.shape[0]].set(b4)
    return p


def _mlp_kernel(s_ref, b_ref, w_ref, p_ref, out_ref, *,
                surge_dim, building_dim, wind_dim, hidden_dim, offs):
    h = hidden_dim
    h2 = 2 * h

    # Static sub-views of the packed parameter block (all offsets are Python ints).
    w_s = p_ref[offs["ws"]:offs["ws"] + surge_dim, 0:h2]
    w_b = p_ref[offs["wb"]:offs["wb"] + building_dim, 0:h2]
    w_w = p_ref[offs["ww"]:offs["ww"] + wind_dim, 0:h2]
    b12 = p_ref[offs["b12"]:offs["b12"] + 1, 0:h2]
    w3 = p_ref[offs["w3"]:offs["w3"] + h2, 0:h]
    b3 = p_ref[offs["b3"]:offs["b3"] + 1, 0:h]
    w4 = p_ref[offs["w4"]:offs["w4"] + h, 0:OUT_PAD]
    b4 = p_ref[offs["b4"]:offs["b4"] + 1, 0:OUT_PAD]

    # Fused fc1/fc2: the two input concats are folded into the row-split of
    # the fused weight, so h12 == [tanh(fc1(cat(s,b))) | tanh(fc2(cat(w,b)))].
    h12 = jnp.tanh(
        jnp.dot(s_ref[...], w_s, preferred_element_type=jnp.float32)
        + jnp.dot(b_ref[...], w_b, preferred_element_type=jnp.float32)
        + jnp.dot(w_ref[...], w_w, preferred_element_type=jnp.float32)
        + b12)
    # fc3 + tanh: single matmul against the unsplit W3 (h12 == cat(x1, x2)).
    h3 = jnp.tanh(jnp.dot(h12, w3, preferred_element_type=jnp.float32) + b3)
    # fc4 (no activation), lane-dense padded output store.
    out_ref[...] = jnp.dot(h3, w4, preferred_element_type=jnp.float32) + b4


def prediction_model_forward(surge_feat, building_feat, wind_feat,
                             packed_params, *, hidden_dim, out_dim=2,
                             block_batch=None):
    """Full forward pass in a single Pallas kernel (4 operands, 3-5 MXU pushes)."""
    batch, surge_dim = surge_feat.shape
    building_dim = building_feat.shape[1]
    wind_dim = wind_feat.shape[1]
    offs, rows, ncols = _packed_layout(surge_dim, building_dim, wind_dim,
                                       hidden_dim)
    assert packed_params.shape == (rows, ncols)

    if block_batch is None:
        # Whole batch in one block when small; 512-row tiles otherwise.
        # (Re-derive a smaller tile for v7x's 64 MiB VMEM if features grow.)
        block_batch = batch if batch <= 512 else 512
    grid = (pl.cdiv(batch, block_batch),)

    kernel = functools.partial(
        _mlp_kernel,
        surge_dim=surge_dim, building_dim=building_dim,
        wind_dim=wind_dim, hidden_dim=hidden_dim, offs=offs)

    padded = pl.pallas_call(
        kernel,
        out_shape=jax.ShapeDtypeStruct((batch, OUT_PAD), jnp.float32),
        grid=grid,
        in_specs=[
            pl.BlockSpec((block_batch, surge_dim), lambda i: (i, 0)),
            pl.BlockSpec((block_batch, building_dim), lambda i: (i, 0)),
            pl.BlockSpec((block_batch, wind_dim), lambda i: (i, 0)),
            # Packed params: constant block index -> stays VMEM resident.
            pl.BlockSpec((rows, ncols), lambda i: (0, 0)),
        ],
        out_specs=pl.BlockSpec((block_batch, OUT_PAD), lambda i: (i, 0)),
        compiler_params=pltpu.CompilerParams(
            dimension_semantics=("parallel",)),
    )(surge_feat, building_feat, wind_feat, packed_params)

    # Drop the zero-padded output lanes.
    return padded[:, :out_dim]


def init_params(key, surge_dim, building_dim, wind_dim, hidden_dim):
    """Deterministic init matching the PyTorch module: W ~ N(0.1, 0.01), b = 0.
    Weights are stored as [in_features, out_features]."""
    ks = jax.random.split(key, 4)

    def w(k, fan_in, fan_out):
        return 0.1 + 0.01 * jax.random.normal(k, (fan_in, fan_out), jnp.float32)

    w1 = w(ks[0], surge_dim + building_dim, hidden_dim)
    b1 = jnp.zeros((hidden_dim,), jnp.float32)
    w2 = w(ks[1], wind_dim + building_dim, hidden_dim)
    b2 = jnp.zeros((hidden_dim,), jnp.float32)
    w3 = w(ks[2], 2 * hidden_dim, hidden_dim)
    b3 = jnp.zeros((hidden_dim,), jnp.float32)
    w4 = w(ks[3], hidden_dim, 2)
    b4 = jnp.zeros((2,), jnp.float32)
    return (w1, b1, w2, b2, w3, b3, w4, b4)


def _reference_forward(surge, building, wind, params):
    """Pure-JAX reference (mirrors the PyTorch module exactly)."""
    w1, b1, w2, b2, w3, b3, w4, b4 = params
    x1 = jnp.tanh(jnp.concatenate([surge, building], axis=1) @ w1 + b1)
    x2 = jnp.tanh(jnp.concatenate([wind, building], axis=1) @ w2 + b2)
    x = jnp.tanh(jnp.concatenate([x1, x2], axis=1) @ w3 + b3)
    return x @ w4 + b4


if __name__ == "__main__":
    batch = 8
    surge_dim, building_dim, wind_dim, hidden_dim = 4, 4, 4, 32

    key = jax.random.PRNGKey(0)
    k_s, k_b, k_w, k_p = jax.random.split(key, 4)

    surge_feat = jax.random.normal(k_s, (batch, surge_dim), jnp.float32)
    building_feat = jax.random.normal(k_b, (batch, building_dim), jnp.float32)
    wind_feat = jax.random.normal(k_w, (batch, wind_dim), jnp.float32)

    params = init_params(k_p, surge_dim, building_dim, wind_dim, hidden_dim)

    # One-time parameter packing (hoisted out of the per-call hot path).
    packed = prepare_params(params, surge_dim, building_dim, wind_dim,
                            hidden_dim)
    packed = jax.block_until_ready(packed)

    fwd = jax.jit(functools.partial(prediction_model_forward,
                                    hidden_dim=hidden_dim))
    logits = fwd(surge_feat, building_feat, wind_feat, packed)
    logits = jax.block_until_ready(logits)

    ref = _reference_forward(surge_feat, building_feat, wind_feat, params)
    assert logits.shape == (batch, 2)
    assert jnp.allclose(logits, ref, atol=1e-5, rtol=1e-5), (
        float(jnp.max(jnp.abs(logits - ref))))

    print("KERNEL_OK")
</pallas_src>

<mosaic_0001>
module attributes {stable_mosaic.version = 11 : i64} {
  func.func @_mlp_kernel(%arg0: i32, %arg1: memref<8x4xf32, #tpu.memory_space<vmem>>, %arg2: memref<8x4xf32, #tpu.memory_space<vmem>>, %arg3: memref<8x4xf32, #tpu.memory_space<vmem>>, %arg4: memref<144x128xf32, #tpu.memory_space<vmem>>, %arg5: memref<8x128xf32, #tpu.memory_space<vmem>>) attributes {dimension_semantics = [#tpu.dimension_semantics<parallel>], iteration_bounds = array<i64: 1>, scalar_prefetch = 0 : i64, scratch_operands = 0 : i64, tpu.core_type = #tpu.core_type<tc>, window_params = [{transform_indices = @transform_0, window_bounds = array<i64: 8, 4>}, {transform_indices = @transform_1, window_bounds = array<i64: 8, 4>}, {transform_indices = @transform_2, window_bounds = array<i64: 8, 4>}, {pipeline_mode = #tpu.pipeline_mode<synchronous>, transform_indices = @transform_3, window_bounds = array<i64: 144, 128>}, {transform_indices = @transform_4, window_bounds = array<i64: 8, 128>}]} {
    %c0 = arith.constant 0 : index
    %c0_0 = arith.constant 0 : index
    %0 = vector.load %arg4[%c0, %c0_0] : memref<144x128xf32, #tpu.memory_space<vmem>>, vector<4x64xf32>
    %c8 = arith.constant 8 : index
    %c0_1 = arith.constant 0 : index
    %1 = vector.load %arg4[%c8, %c0_1] : memref<144x128xf32, #tpu.memory_space<vmem>>, vector<4x64xf32>
    %c16 = arith.constant 16 : index
    %c0_2 = arith.constant 0 : index
    %2 = vector.load %arg4[%c16, %c0_2] : memref<144x128xf32, #tpu.memory_space<vmem>>, vector<4x64xf32>
    %c24 = arith.constant 24 : index
    %c0_3 = arith.constant 0 : index
    %3 = vector.load %arg4[%c24, %c0_3] : memref<144x128xf32, #tpu.memory_space<vmem>>, vector<1x64xf32>
    %c32 = arith.constant 32 : index
    %c0_4 = arith.constant 0 : index
    %4 = vector.load %arg4[%c32, %c0_4] : memref<144x128xf32, #tpu.memory_space<vmem>>, vector<64x32xf32>
    %c96 = arith.constant 96 : index
    %c0_5 = arith.constant 0 : index
    %5 = vector.load %arg4[%c96, %c0_5] : memref<144x128xf32, #tpu.memory_space<vmem>>, vector<1x32xf32>
    %c104 = arith.constant 104 : index
    %c0_6 = arith.constant 0 : index
    %6 = vector.load %arg4[%c104, %c0_6] : memref<144x128xf32, #tpu.memory_space<vmem>>, vector<32x128xf32>
    %c136 = arith.constant 136 : index
    %c0_7 = arith.constant 0 : index
    %7 = vector.load %arg4[%c136, %c0_7] : memref<144x128xf32, #tpu.memory_space<vmem>>, vector<1x128xf32>
    %c0_8 = arith.constant 0 : index
    %c0_9 = arith.constant 0 : index
    %8 = vector.load %arg1[%c0_8, %c0_9] : memref<8x4xf32, #tpu.memory_space<vmem>>, vector<8x4xf32>
    %cst = arith.constant dense<0.000000e+00> : vector<8x64xf32>
    %9 = tpu.matmul %8, %0, %cst {dimension_numbers = #tpu.dot_dimension_numbers<[1], [0], [0], [1], [0, 0, 1, 1], [], []>} : vector<8x4xf32>, vector<4x64xf32>, vector<8x64xf32> -> vector<8x64xf32>
    %c0_10 = arith.constant 0 : index
    %c0_11 = arith.constant 0 : index
    %10 = vector.load %arg2[%c0_10, %c0_11] : memref<8x4xf32, #tpu.memory_space<vmem>>, vector<8x4xf32>
    %cst_12 = arith.constant dense<0.000000e+00> : vector<8x64xf32>
    %11 = tpu.matmul %10, %1, %cst_12 {dimension_numbers = #tpu.dot_dimension_numbers<[1], [0], [0], [1], [0, 0, 1, 1], [], []>} : vector<8x4xf32>, vector<4x64xf32>, vector<8x64xf32> -> vector<8x64xf32>
    %12 = arith.addf %9, %11 : vector<8x64xf32>
    %c0_13 = arith.constant 0 : index
    %c0_14 = arith.constant 0 : index
    %13 = vector.load %arg3[%c0_13, %c0_14] : memref<8x4xf32, #tpu.memory_space<vmem>>, vector<8x4xf32>
    %cst_15 = arith.constant dense<0.000000e+00> : vector<8x64xf32>
    %14 = tpu.matmul %13, %2, %cst_15 {dimension_numbers = #tpu.dot_dimension_numbers<[1], [0], [0], [1], [0, 0, 1, 1], [], []>} : vector<8x4xf32>, vector<4x64xf32>, vector<8x64xf32> -> vector<8x64xf32>
    %15 = arith.addf %12, %14 : vector<8x64xf32>
    %16 = vector.broadcast %3 : vector<1x64xf32> to vector<8x64xf32>
    %17 = arith.addf %15, %16 : vector<8x64xf32>
    %18 = math.tanh %17 : vector<8x64xf32>
    %cst_16 = arith.constant dense<0.000000e+00> : vector<8x32xf32>
    %19 = tpu.matmul %18, %4, %cst_16 {dimension_numbers = #tpu.dot_dimension_numbers<[1], [0], [0], [1], [0, 0, 1, 1], [], []>} : vector<8x64xf32>, vector<64x32xf32>, vector<8x32xf32> -> vector<8x32xf32>
    %20 = vector.broadcast %5 : vector<1x32xf32> to vector<8x32xf32>
    %21 = arith.addf %19, %20 : vector<8x32xf32>
    %22 = math.tanh %21 : vector<8x32xf32>
    %cst_17 = arith.constant dense<0.000000e+00> : vector<8x128xf32>
    %23 = tpu.matmul %22, %6, %cst_17 {dimension_numbers = #tpu.dot_dimension_numbers<[1], [0], [0], [1], [0, 0, 1, 1], [], []>} : vector<8x32xf32>, vector<32x128xf32>, vector<8x128xf32> -> vector<8x128xf32>
    %24 = vector.broadcast %7 : vector<1x128xf32> to vector<8x128xf32>
    %25 = arith.addf %23, %24 : vector<8x128xf32>
    %c0_18 = arith.constant 0 : index
    %c0_19 = arith.constant 0 : index
    %26 = vector.load %arg5[%c0_18, %c0_19] : memref<8x128xf32, #tpu.memory_space<vmem>>, vector<8x128xf32>
    tpu.vector_store %arg5[%c0_18, %c0_19], %25 {strides = array<i32>} : memref<8x128xf32, #tpu.memory_space<vmem>>, vector<8x128xf32>,
    return
  }
  func.func @transform_0(%arg0: i32) -> (i32, i32) {
    %c0_i32 = arith.constant 0 : i32
    %c0_i32_0 = arith.constant 0 : i32
    return %arg0, %c0_i32 : i32, i32
  }
  func.func @transform_1(%arg0: i32) -> (i32, i32) {
    %c0_i32 = arith.constant 0 : i32
    %c0_i32_0 = arith.constant 0 : i32
    return %arg0, %c0_i32 : i32, i32
  }
  func.func @transform_2(%arg0: i32) -> (i32, i32) {
    %c0_i32 = arith.constant 0 : i32
    %c0_i32_0 = arith.constant 0 : i32
    return %arg0, %c0_i32 : i32, i32
  }
  func.func @transform_3(%arg0: i32) -> (i32, i32) {
    %c0_i32 = arith.constant 0 : i32
    %c0_i32_0 = arith.constant 0 : i32
    %c0_i32_1 = arith.constant 0 : i32
    return %c0_i32, %c0_i32_0 : i32, i32
  }
  func.func @transform_4(%arg0: i32) -> (i32, i32) {
    %c0_i32 = arith.constant 0 : i32
    %c0_i32_0 = arith.constant 0 : i32
    return %arg0, %c0_i32 : i32, i32
  }
}

</mosaic_0001>

<llo_original>
// kernel: prediction_model_forward.1
$region0: #{prediction_model_forward.1}
  #allocation0 [shape = 'u32[]', space=smem, size = 0x4, offset = 0x4, fixed_abs, tag = 'smem constant byte address 0x4 - core index']
  #allocation1 [shape = 'u32[144,128]{1,0:T(1,128)}', space=vmem, size = 0x12000, scoped, tag = 'internal scratch']
  %s0 = inlined_call_operand.vmem [shape: f32[8,4], index: 0, kind: input, shape index: {}]
  %s1 = inlined_call_operand.vmem [shape: f32[8,4], index: 1, kind: input, shape index: {}]
  %s2 = inlined_call_operand.vmem [shape: f32[8,4], index: 2, kind: input, shape index: {}]
  %s3 = inlined_call_operand.hbm [shape: f32[144,128], index: 3, kind: input, shape index: {}]
  %s4 = inlined_call_operand.vmem [shape: f32[8,128], index: 4, kind: output, shape index: {}]
  %s5 = sld [smem:[#allocation0]]
  $region30: #{prediction_model_forward.1} parent=0
    _
  %s7 = ssub.s32 1, %s5
  %s8 = scalar_select 0, %s7, %s5
  $region1: #{prediction_model_forward.1} parent=0
    #allocation2 [shape = 'u8[73728]{0}', space=vmem, size = 0x12000, scoped, tag = 'input window, operand 3, single buffered']
    #allocation3 [shape = 's32[1]{0}', space=sflag, size = 0x4, scoped, tag = 'scoped memory for prediction_model_forward.1']
    %9 = vsyncpa [#allocation3], 0
    // Predicated region
    $region2: #{prediction_model_forward.1} parent=1 // pred_check
      _
    $region3: #{prediction_model_forward.1} parent=1 // pred_check_branch
      %11 = sbr.rel (0) target = $region5
    $region4: #{prediction_model_forward.1} parent=1 // pred_region
      _
    $region5: #{prediction_model_forward.1} parent=1 // pred_fallthru
      _
    // Predicated region
    $region6: #{prediction_model_forward.1} parent=1 // pred_check
      _
    $region7: #{prediction_model_forward.1} parent=1 // pred_check_branch
      %13 = sbr.rel (0) target = $region9
    $region8: #{prediction_model_forward.1} parent=1 // pred_region
      _
    $region9: #{prediction_model_forward.1} parent=1 // pred_fallthru
      _
    // Predicated region
    $region10: #{prediction_model_forward.1} parent=1 // pred_check
      _
    $region11: #{prediction_model_forward.1} parent=1 // pred_check_branch
      %15 = sbr.rel (0) target = $region13
    $region12: #{prediction_model_forward.1} parent=1 // pred_region
      _
    $region13: #{prediction_model_forward.1} parent=1 // pred_fallthru
      _
    // Predicated region
    $region14: #{prediction_model_forward.1} parent=1 // pred_check
      _
    $region15: #{prediction_model_forward.1} parent=1 // pred_check_branch
      %17 = sbr.rel (0) target = $region17
    $region16: #{prediction_model_forward.1} parent=1 // pred_region
      %s19 = ssub.s32 2304, 2304
      %20 = vsyncadd [#allocation3], %s19
      %s21 = sshll.u32 [#allocation2], 4
      %s22 = int_to_ptr.vmem [resolvable:$true] %s21
      %27 = dma.hbm_to_vmem [thread:$0]  %s3, 2304, %s22, [#allocation3], 128, 128, 8
    $region17: #{prediction_model_forward.1} parent=1 // pred_fallthru
      _
    // Predicated region
    $region18: #{prediction_model_forward.1} parent=1 // pred_check
      _
    $region19: #{prediction_model_forward.1} parent=1 // pred_check_branch
      %29 = sbr.rel (0) target = $region21
    $region20: #{prediction_model_forward.1} parent=1 // pred_region
      %30 = dma.done [#allocation3], 2304
    $region21: #{prediction_model_forward.1} parent=1 // pred_fallthru
      _
    %v31 = vld [vmem:[#allocation2] sm:$0xf]
    %v32 = vld [vmem:[#allocation2 + $0x8] sm:$0xf]
    %v33 = vld [vmem:[#allocation2 + $0x10] sm:$0xf]
    %v34 = vld [vmem:[#allocation2 + $0x18] sm:$0x1]
    %v35 = vld [vmem:[#allocation2 + $0x20] sm:$0xff]
    %v36 = vld [vmem:[#allocation2 + $0x28] sm:$0xff]
    %v37 = vld [vmem:[#allocation2 + $0x30] sm:$0xff]
    %v38 = vld [vmem:[#allocation2 + $0x38] sm:$0xff]
    %v39 = vld [vmem:[#allocation2 + $0x40] sm:$0xff]
    %v40 = vld [vmem:[#allocation2 + $0x48] sm:$0xff]
    %v41 = vld [vmem:[#allocation2 + $0x50] sm:$0xff]
    %v42 = vld [vmem:[#allocation2 + $0x58] sm:$0xff]
    %v43 = vld [vmem:[#allocation2 + $0x60] sm:$0x1]
    %v44 = vld [vmem:[#allocation2 + $0x68] sm:$0xff]
    %v45 = vld [vmem:[#allocation2 + $0x70] sm:$0xff]
    %v46 = vld [vmem:[#allocation2 + $0x78] sm:$0xff]
    %v47 = vld [vmem:[#allocation2 + $0x80] sm:$0xff]
    %v48 = vld [vmem:[#allocation2 + $0x88] sm:$0x1]
    %v49 = vld [vmem:[%s0] sm:$0xff]
    %v50 = vld [vmem:[%s1] sm:$0xff]
    %vm51 = vcmask 31744
    %v53 = vsel %vm51, %v50, 0
    %vm55 = vcmask 1043456
    %v57 = vsel %vm55, %v32, 0
    %59 = vmatprep.subr.mxu0 0.0
    %60 = vmatpush1.msra.mxu0 %v57
    %61 = vmatprep.subr.mxu0 0.0
    %62 = vmatpush1.msra.mxu0 0.0
    %63 = vmatprep.subr.mxu0 0.0
    %64 = vmatpush1.msra.mxu0 0.0
    %65 = vmatprep.subr.mxu0 0.0
    %66 = vmatpush1.msra.mxu0 0.0
    %67 = vmatprep.subr.mxu0 0.0
    %68 = vmatpush1.msra.mxu0 0.0
    %69 = vmatprep.subr.mxu0 0.0
    %70 = vmatpush1.msra.mxu0 0.0
    %71 = vmatprep.subr.mxu0 0.0
    %72 = vmatpush1.msra.mxu0 0.0
    %73 = vmatprep.subr.mxu0 0.0
    %74 = vmatpush1.msra.mxu0 0.0
    %75 = vmatprep.subr.mxu0 0.0
    %76 = vmatpush1.msra.mxu0 0.0
    %77 = vmatprep.subr.mxu0 0.0
    %78 = vmatpush1.msra.mxu0 0.0
    %79 = vmatprep.subr.mxu0 0.0
    %80 = vmatpush1.msra.mxu0 0.0
    %81 = vmatprep.subr.mxu0 0.0
    %82 = vmatpush1.msra.mxu0 0.0
    %83 = vmatprep.subr.mxu0 0.0
    %84 = vmatpush1.msra.mxu0 0.0
    %85 = vmatprep.subr.mxu0 0.0
    %86 = vmatpush1.msra.mxu0 0.0
    %87 = vmatprep.subr.mxu0 0.0
    %88 = vmatpush1.msra.mxu0 0.0
    %89 = vmatprep.subr.mxu0 0.0
    %90 = vmatpush1.msra.mxu0 0.0
    %91 = vmatprep.subr.mxu0 0.0
    %92 = vmatpush1.msra.mxu0 0.0
    %93 = vmatprep.subr.mxu0 0.0
    %94 = vmatpush1.msra.mxu0 0.0
    %95 = vmatprep.subr.mxu0 0.0
    %96 = vmatpush1.msra.mxu0 0.0
    %97 = vmatprep.subr.mxu0 0.0
    %98 = vmatpush1.msra.mxu0 0.0
    %99 = vmatprep.subr.mxu0 0.0
    %100 = vmatpush1.msra.mxu0 0.0
    %101 = vmatprep.subr.mxu0 0.0
    %102 = vmatpush1.msra.mxu0 0.0
    %103 = vmatprep.subr.mxu0 0.0
    %104 = vmatpush1.msra.mxu0 0.0
    %105 = vmatprep.subr.mxu0 0.0
    %106 = vmatpush1.msra.mxu0 0.0
    %107 = vmatprep.subr.mxu0 0.0
    %108 = vmatpush1.msra.mxu0 0.0
    %109 = vmatprep.subr.mxu0 0.0
    %110 = vmatpush1.msra.mxu0 0.0
    %111 = vmatprep.subr.mxu0 0.0
    %112 = vmatpush1.msra.mxu0 0.0
    %113 = vmatprep.subr.mxu0 0.0
    %114 = vmatpush1.msra.mxu0 0.0
    %115 = vmatprep.subr.mxu0 0.0
    %116 = vmatpush1.msra.mxu0 0.0
    %117 = vmatprep.subr.mxu0 0.0
    %118 = vmatpush1.msra.mxu0 0.0
    %119 = vmatprep.subr.mxu0 0.0
    %120 = vmatpush1.msra.mxu0 0.0
    %121 = vmatprep.subr.mxu0 0.0
    %122 = vmatpush1.msra.mxu0 0.0
    %123 = vmatprep.mubr.f32.mxu0 0.0
    %124 = vmatmul.mubr.f32.gmra.mrb[0].mxu0 %v53
    %v125 = vpop.f32.mrb[0].mxu0
    %v126 = vadd.f32 0.0, %v125
    %v127 = vpop.f32.mrb[0].mxu0
    %128 = vdwg.mxu0
    %v130 = vsel %vm51, %v49, 0
    %v133 = vsel %vm55, %v31, 0
    %135 = vmatprep.subr.mxu0 0.0
    %136 = vmatpush1.msra.mxu0 %v133
    %137 = vmatprep.subr.mxu0 0.0
    %138 = vmatpush1.msra.mxu0 0.0
    %139 = vmatprep.subr.mxu0 0.0
    %140 = vmatpush1.msra.mxu0 0.0
    %141 = vmatprep.subr.mxu0 0.0
    %142 = vmatpush1.msra.mxu0 0.0
    %143 = vmatprep.subr.mxu0 0.0
    %144 = vmatpush1.msra.mxu0 0.0
    %145 = vmatprep.subr.mxu0 0.0
    %146 = vmatpush1.msra.mxu0 0.0
    %147 = vmatprep.subr.mxu0 0.0
    %148 = vmatpush1.msra.mxu0 0.0
    %149 = vmatprep.subr.mxu0 0.0
    %150 = vmatpush1.msra.mxu0 0.0
    %151 = vmatprep.subr.mxu0 0.0
    %152 = vmatpush1.msra.mxu0 0.0
    %153 = vmatprep.subr.mxu0 0.0
    %154 = vmatpush1.msra.mxu0 0.0
    %155 = vmatprep.subr.mxu0 0.0
    %156 = vmatpush1.msra.mxu0 0.0
    %157 = vmatprep.subr.mxu0 0.0
    %158 = vmatpush1.msra.mxu0 0.0
    %159 = vmatprep.subr.mxu0 0.0
    %160 = vmatpush1.msra.mxu0 0.0
    %161 = vmatprep.subr.mxu0 0.0
    %162 = vmatpush1.msra.mxu0 0.0
    %163 = vmatprep.subr.mxu0 0.0
    %164 = vmatpush1.msra.mxu0 0.0
    %165 = vmatprep.subr.mxu0 0.0
    %166 = vmatpush1.msra.mxu0 0.0
    %167 = vmatprep.subr.mxu0 0.0
    %168 = vmatpush1.msra.mxu0 0.0
    %169 = vmatprep.subr.mxu0 0.0
    %170 = vmatpush1.msra.mxu0 0.0
    %171 = vmatprep.subr.mxu0 0.0
    %172 = vmatpush1.msra.mxu0 0.0
    %173 = vmatprep.subr.mxu0 0.0
    %174 = vmatpush1.msra.mxu0 0.0
    %175 = vmatprep.subr.mxu0 0.0
    %176 = vmatpush1.msra.mxu0 0.0
    %177 = vmatprep.subr.mxu0 0.0
    %178 = vmatpush1.msra.mxu0 0.0
    %179 = vmatprep.subr.mxu0 0.0
    %180 = vmatpush1.msra.mxu0 0.0
    %181 = vmatprep.subr.mxu0 0.0
    %182 = vmatpush1.msra.mxu0 0.0
    %183 = vmatprep.subr.mxu0 0.0
    %184 = vmatpush1.msra.mxu0 0.0
    %185 = vmatprep.subr.mxu0 0.0
    %186 = vmatpush1.msra.mxu0 0.0
    %187 = vmatprep.subr.mxu0 0.0
    %188 = vmatpush1.msra.mxu0 0.0
    %189 = vmatprep.subr.mxu0 0.0
    %190 = vmatpush1.msra.mxu0 0.0
    %191 = vmatprep.subr.mxu0 0.0
    %192 = vmatpush1.msra.mxu0 0.0
    %193 = vmatprep.subr.mxu0 0.0
    %194 = vmatpush1.msra.mxu0 0.0
    %195 = vmatprep.subr.mxu0 0.0
    %196 = vmatpush1.msra.mxu0 0.0
    %197 = vmatprep.subr.mxu0 0.0
    %198 = vmatpush1.msra.mxu0 0.0
    %199 = vmatprep.mubr.f32.mxu0 0.0
    %200 = vmatmul.mubr.f32.gmra.mrb[0].mxu0 %v130
    %v201 = vpop.f32.mrb[0].mxu0
    %v202 = vadd.f32 %v126, %v201
    %v203 = vpop.f32.mrb[0].mxu0
    %204 = vdwg.mxu0
    %v205 = vld [vmem:[%s2] sm:$0xff]
    %v207 = vsel %vm51, %v205, 0
    %v210 = vsel %vm55, %v33, 0
    %212 = vmatprep.subr.mxu0 0.0
    %213 = vmatpush1.msra.mxu0 %v210
    %214 = vmatprep.subr.mxu0 0.0
    %215 = vmatpush1.msra.mxu0 0.0
    %216 = vmatprep.subr.mxu0 0.0
    %217 = vmatpush1.msra.mxu0 0.0
    %218 = vmatprep.subr.mxu0 0.0
    %219 = vmatpush1.msra.mxu0 0.0
    %220 = vmatprep.subr.mxu0 0.0
    %221 = vmatpush1.msra.mxu0 0.0
    %222 = vmatprep.subr.mxu0 0.0
    %223 = vmatpush1.msra.mxu0 0.0
    %224 = vmatprep.subr.mxu0 0.0
    %225 = vmatpush1.msra.mxu0 0.0
    %226 = vmatprep.subr.mxu0 0.0
    %227 = vmatpush1.msra.mxu0 0.0
    %228 = vmatprep.subr.mxu0 0.0
    %229 = vmatpush1.msra.mxu0 0.0
    %230 = vmatprep.subr.mxu0 0.0
    %231 = vmatpush1.msra.mxu0 0.0
    %232 = vmatprep.subr.mxu0 0.0
    %233 = vmatpush1.msra.mxu0 0.0
    %234 = vmatprep.subr.mxu0 0.0
    %235 = vmatpush1.msra.mxu0 0.0
    %236 = vmatprep.subr.mxu0 0.0
    %237 = vmatpush1.msra.mxu0 0.0
    %238 = vmatprep.subr.mxu0 0.0
    %239 = vmatpush1.msra.mxu0 0.0
    %240 = vmatprep.subr.mxu0 0.0
    %241 = vmatpush1.msra.mxu0 0.0
    %242 = vmatprep.subr.mxu0 0.0
    %243 = vmatpush1.msra.mxu0 0.0
    %244 = vmatprep.subr.mxu0 0.0
    %245 = vmatpush1.msra.mxu0 0.0
    %246 = vmatprep.subr.mxu0 0.0
    %247 = vmatpush1.msra.mxu0 0.0
    %248 = vmatprep.subr.mxu0 0.0
    %249 = vmatpush1.msra.mxu0 0.0
    %250 = vmatprep.subr.mxu0 0.0
    %251 = vmatpush1.msra.mxu0 0.0
    %252 = vmatprep.subr.mxu0 0.0
    %253 = vmatpush1.msra.mxu0 0.0
    %254 = vmatprep.subr.mxu0 0.0
    %255 = vmatpush1.msra.mxu0 0.0
    %256 = vmatprep.subr.mxu0 0.0
    %257 = vmatpush1.msra.mxu0 0.0
    %258 = vmatprep.subr.mxu0 0.0
    %259 = vmatpush1.msra.mxu0 0.0
    %260 = vmatprep.subr.mxu0 0.0
    %261 = vmatpush1.msra.mxu0 0.0
    %262 = vmatprep.subr.mxu0 0.0
    %263 = vmatpush1.msra.mxu0 0.0
    %264 = vmatprep.subr.mxu0 0.0
    %265 = vmatpush1.msra.mxu0 0.0
    %266 = vmatprep.subr.mxu0 0.0
    %267 = vmatpush1.msra.mxu0 0.0
    %268 = vmatprep.subr.mxu0 0.0
    %269 = vmatpush1.msra.mxu0 0.0
    %270 = vmatprep.subr.mxu0 0.0
    %271 = vmatpush1.msra.mxu0 0.0
    %272 = vmatprep.subr.mxu0 0.0
    %273 = vmatpush1.msra.mxu0 0.0
    %274 = vmatprep.subr.mxu0 0.0
    %275 = vmatpush1.msra.mxu0 0.0
    %276 = vmatprep.mubr.f32.mxu0 0.0
    %277 = vmatmul.mubr.f32.gmra.mrb[0].mxu0 %v207
    %v278 = vpop.f32.mrb[0].mxu0
    %v279 = vadd.f32 0.0, %v278
    %v280 = vpop.f32.mrb[0].mxu0
    %281 = vdwg.mxu0
    %v282 = vadd.f32 %v202, %v279
    %v283 = vlaneseq
    %v284 = vshrl.u32 %v283, 7
    %v285 = vsub.s32 0, %v284
    %v286 = vrot.slane %v34, %v285
    %v287 = vadd.f32 %v282, %v286
    %v288 = vtanh.pop %v287
    %v289 = vlaneseq
    %v290 = vshrl.u32 %v289, 7
    %v291 = vsub.s32 0, %v290
    %v292 = vrot.slane %v43, %v291
    %vm293 = vcmask 523264
    %v295 = vsel %vm293, %v288, 0
    %297 = vmatprep.subr.mxu0 0.0
    %298 = vmatpush1.msra.mxu0 %v35
    %299 = vmatprep.subr.mxu0 0.0
    %300 = vmatpush1.msra.mxu0 %v36
    %301 = vmatprep.subr.mxu0 0.0
    %302 = vmatpush1.msra.mxu0 %v37
    %303 = vmatprep.subr.mxu0 0.0
    %304 = vmatpush1.msra.mxu0 %v38
    %305 = vmatprep.subr.mxu0 0.0
    %306 = vmatpush1.msra.mxu0 %v39
    %307 = vmatprep.subr.mxu0 0.0
    %308 = vmatpush1.msra.mxu0 %v40
    %309 = vmatprep.subr.mxu0 0.0
    %310 = vmatpush1.msra.mxu0 %v41
    %311 = vmatprep.subr.mxu0 0.0
    %312 = vmatpush1.msra.mxu0 %v42
    %313 = vmatprep.subr.mxu0 0.0
    %314 = vmatpush1.msra.mxu0 0.0
    %315 = vmatprep.subr.mxu0 0.0
    %316 = vmatpush1.msra.mxu0 0.0
    %317 = vmatprep.subr.mxu0 0.0
    %318 = vmatpush1.msra.mxu0 0.0
    %319 = vmatprep.subr.mxu0 0.0
    %320 = vmatpush1.msra.mxu0 0.0
    %321 = vmatprep.subr.mxu0 0.0
    %322 = vmatpush1.msra.mxu0 0.0
    %323 = vmatprep.subr.mxu0 0.0
    %324 = vmatpush1.msra.mxu0 0.0
    %325 = vmatprep.subr.mxu0 0.0
    %326 = vmatpush1.msra.mxu0 0.0
    %327 = vmatprep.subr.mxu0 0.0
    %328 = vmatpush1.msra.mxu0 0.0
    %329 = vmatprep.subr.mxu0 0.0
    %330 = vmatpush1.msra.mxu0 0.0
    %331 = vmatprep.subr.mxu0 0.0
    %332 = vmatpush1.msra.mxu0 0.0
    %333 = vmatprep.subr.mxu0 0.0
    %334 = vmatpush1.msra.mxu0 0.0
    %335 = vmatprep.subr.mxu0 0.0
    %336 = vmatpush1.msra.mxu0 0.0
    %337 = vmatprep.subr.mxu0 0.0
    %338 = vmatpush1.msra.mxu0 0.0
    %339 = vmatprep.subr.mxu0 0.0
    %340 = vmatpush1.msra.mxu0 0.0
    %341 = vmatprep.subr.mxu0 0.0
    %342 = vmatpush1.msra.mxu0 0.0
    %343 = vmatprep.subr.mxu0 0.0
    %344 = vmatpush1.msra.mxu0 0.0
    %345 = vmatprep.subr.mxu0 0.0
    %346 = vmatpush1.msra.mxu0 0.0
    %347 = vmatprep.subr.mxu0 0.0
    %348 = vmatpush1.msra.mxu0 0.0
    %349 = vmatprep.subr.mxu0 0.0
    %350 = vmatpush1.msra.mxu0 0.0
    %351 = vmatprep.subr.mxu0 0.0
    %352 = vmatpush1.msra.mxu0 0.0
    %353 = vmatprep.subr.mxu0 0.0
    %354 = vmatpush1.msra.mxu0 0.0
    %355 = vmatprep.subr.mxu0 0.0
    %356 = vmatpush1.msra.mxu0 0.0
    %357 = vmatprep.subr.mxu0 0.0
    %358 = vmatpush1.msra.mxu0 0.0
    %359 = vmatprep.subr.mxu0 0.0
    %360 = vmatpush1.msra.mxu0 0.0
    %361 = vmatprep.mubr.f32.mxu0 0.0
    %362 = vmatmul.mubr.f32.gmra.mrb[0].mxu0 %v295
    %v363 = vpop.f32.mrb[0].mxu0
    %v364 = vadd.f32 %v292, %v363
    %v365 = vpop.f32.mrb[0].mxu0
    %366 = vdwg.mxu0
    %v367 = vtanh.pop %v364
    %v368 = vlaneseq
    %v369 = vshrl.u32 %v368, 7
    %v370 = vsub.s32 0, %v369
    %v371 = vrot.slane %v48, %v370
    %vm372 = vcmask 261120
    %v374 = vsel %vm372, %v367, 0
    %376 = vmatprep.subr.mxu0 0.0
    %377 = vmatpush1.msra.mxu0 %v44
    %378 = vmatprep.subr.mxu0 0.0
    %379 = vmatpush1.msra.mxu0 %v45
    %380 = vmatprep.subr.mxu0 0.0
    %381 = vmatpush1.msra.mxu0 %v46
    %382 = vmatprep.subr.mxu0 0.0
    %383 = vmatpush1.msra.mxu0 %v47
    %384 = vmatprep.subr.mxu0 0.0
    %385 = vmatpush1.msra.mxu0 0.0
    %386 = vmatprep.subr.mxu0 0.0
    %387 = vmatpush1.msra.mxu0 0.0
    %388 = vmatprep.subr.mxu0 0.0
    %389 = vmatpush1.msra.mxu0 0.0
    %390 = vmatprep.subr.mxu0 0.0
    %391 = vmatpush1.msra.mxu0 0.0
    %392 = vmatprep.subr.mxu0 0.0
    %393 = vmatpush1.msra.mxu0 0.0
    %394 = vmatprep.subr.mxu0 0.0
    %395 = vmatpush1.msra.mxu0 0.0
    %396 = vmatprep.subr.mxu0 0.0
    %397 = vmatpush1.msra.mxu0 0.0
    %398 = vmatprep.subr.mxu0 0.0
    %399 = vmatpush1.msra.mxu0 0.0
    %400 = vmatprep.subr.mxu0 0.0
    %401 = vmatpush1.msra.mxu0 0.0
    %402 = vmatprep.subr.mxu0 0.0
    %403 = vmatpush1.msra.mxu0 0.0
    %404 = vmatprep.subr.mxu0 0.0
    %405 = vmatpush1.msra.mxu0 0.0
    %406 = vmatprep.subr.mxu0 0.0
    %407 = vmatpush1.msra.mxu0 0.0
    %408 = vmatprep.subr.mxu0 0.0
    %409 = vmatpush1.msra.mxu0 0.0
    %410 = vmatprep.subr.mxu0 0.0
    %411 = vmatpush1.msra.mxu0 0.0
    %412 = vmatprep.subr.mxu0 0.0
    %413 = vmatpush1.msra.mxu0 0.0
    %414 = vmatprep.subr.mxu0 0.0
    %415 = vmatpush1.msra.mxu0 0.0
    %416 = vmatprep.subr.mxu0 0.0
    %417 = vmatpush1.msra.mxu0 0.0
    %418 = vmatprep.subr.mxu0 0.0
    %419 = vmatpush1.msra.mxu0 0.0
    %420 = vmatprep.subr.mxu0 0.0
    %421 = vmatpush1.msra.mxu0 0.0
    %422 = vmatprep.subr.mxu0 0.0
    %423 = vmatpush1.msra.mxu0 0.0
    %424 = vmatprep.subr.mxu0 0.0
    %425 = vmatpush1.msra.mxu0 0.0
    %426 = vmatprep.subr.mxu0 0.0
    %427 = vmatpush1.msra.mxu0 0.0
    %428 = vmatprep.subr.mxu0 0.0
    %429 = vmatpush1.msra.mxu0 0.0
    %430 = vmatprep.subr.mxu0 0.0
    %431 = vmatpush1.msra.mxu0 0.0
    %432 = vmatprep.subr.mxu0 0.0
    %433 = vmatpush1.msra.mxu0 0.0
    %434 = vmatprep.subr.mxu0 0.0
    %435 = vmatpush1.msra.mxu0 0.0
    %436 = vmatprep.subr.mxu0 0.0
    %437 = vmatpush1.msra.mxu0 0.0
    %438 = vmatprep.subr.mxu0 0.0
    %439 = vmatpush1.msra.mxu0 0.0
    %440 = vmatprep.mubr.f32.mxu0 0.0
    %441 = vmatmul.mubr.f32.gmra.mrb[0].mxu0 %v374
    %v442 = vpop.f32.mrb[0].mxu0
    %v443 = vadd.f32 %v371, %v442
    %v444 = vpop.f32.mrb[0].mxu0
    %445 = vdwg.mxu0
    %446 = vst [vmem:[%s4] sm:$0xff] %v443
    // Predicated region
    $region22: #{prediction_model_forward.1} parent=1 // pred_check
      _
    $region23: #{prediction_model_forward.1} parent=1 // pred_check_branch
      %448 = sbr.rel (0) target = $region25
    $region24: #{prediction_model_forward.1} parent=1 // pred_region
      _
    $region25: #{prediction_model_forward.1} parent=1 // pred_fallthru
      _
    // Predicated region
    $region26: #{prediction_model_forward.1} parent=1 // pred_check
      _
    $region27: #{prediction_model_forward.1} parent=1 // pred_check_branch
      %450 = sbr.rel (0) target = $region29
    $region28: #{prediction_model_forward.1} parent=1 // pred_region
      _
    $region29: #{prediction_model_forward.1} parent=1 // pred_fallthru
      _
    %451 = vsyncpa [#allocation3], 1

</llo_original>
